<compile_context>
chip_gen: v7x
topology: tpu7x:2x2x1
jax: 0.10.0
libtpu: 0.0.40
codegen_flags: <defaults>
</compile_context>

<pallas_src>
import jax
import jax.numpy as jnp
from jax import lax
from jax.experimental import pallas as pl
from jax.experimental.pallas import tpu as pltpu


def _round_up(x, m):
    return ((x + m - 1) // m) * m


def _divisor_tile(dim, preferred, granule):
    """Largest multiple of `granule` that divides `dim` and is <= `preferred`.
    Falls back to the full dim for small / non-aligned shapes (single block)."""
    if dim % granule != 0:
        # TODO(synk): for very large non-128-aligned layers, pad the weight once
        # at parameter-load time instead of falling back to a full-dim block.
        return dim
    t = min(preferred, dim)
    t -= t % granule
    while dim % t != 0:
        t -= granule
    return t


def _lora_linear_kernel(x_ref, w_ref, b_ref, a_ref, bias_ref, o_ref,
                        acc_ref, bx_ref):
    j = pl.program_id(1)          # N (out_features) tile
    k = pl.program_id(2)          # K (in_features) tile — reduction, innermost
    nk = pl.num_programs(2)

    @pl.when(k == 0)
    def _():
        acc_ref[...] = jnp.zeros_like(acc_ref)

    # LoRA down-projection accumulator: rebuilt once per M tile while sweeping
    # K during the first N tile, then stays resident for all other N tiles.
    @pl.when(jnp.logical_and(j == 0, k == 0))
    def _():
        bx_ref[...] = jnp.zeros_like(bx_ref)

    x = x_ref[...]

    # Frozen base path: acc += x_tile @ W[j_tile, k_tile]^T
    # (native [out, in] layout consumed via contracting dims — no wrapper .T)
    acc_ref[...] += lax.dot_general(
        x, w_ref[...], (((1,), (1,)), ((), ())),
        preferred_element_type=jnp.float32)

    # LoRA down-projection: bx += x_tile @ B[:, k_tile]^T, only during j == 0.
    @pl.when(j == 0)
    def _():
        bx_ref[...] += lax.dot_general(
            x, b_ref[...], (((1,), (1,)), ((), ())),
            preferred_element_type=jnp.float32)

    # Finalize once per output tile: LoRA up-projection + bias + cast.
    @pl.when(k == nk - 1)
    def _():
        abx = lax.dot_general(
            bx_ref[...].astype(a_ref.dtype), a_ref[...],
            (((1,), (1,)), ((), ())),
            preferred_element_type=jnp.float32)
        o_ref[...] = (acc_ref[...] + abx + bias_ref[...]).astype(o_ref.dtype)


def lora_linear(x, weight, bias, A, B, *, param_dtype=None,
                tm_pref=256, tn_pref=256, tk_pref=512,
                vmem_limit_bytes=48 * 1024 * 1024):
    """LoRA linear forward.

    x      : [batch, in_features]
    weight : [out_features, in_features]  (frozen, native layout)
    bias   : [out_features]
    A      : [out_features, r]
    B      : [r, in_features]

    param_dtype: e.g. jnp.bfloat16 to halve HBM weight traffic / use the bf16
    MXU path; accumulation stays in f32 and the output keeps x's dtype.
    Tile defaults target the 256x256 MXU of v6e/v7x (on v5e, 128-granule tiles
    are picked automatically when 256 does not divide the dim).
    """
    out_dtype = x.dtype
    batch, in_features = x.shape
    out_features, _ = weight.shape
    r = A.shape[1]

    if param_dtype is not None:
        # (In a real deployment, store the params pre-cast instead of casting
        #  per forward call.)
        x = x.astype(param_dtype)
        weight = weight.astype(param_dtype)
        A = A.astype(param_dtype)
        B = B.astype(param_dtype)
    bias2d = bias.astype(jnp.float32).reshape(1, out_features)

    # Lane-pad the rank dimension to 128 so the [*, r] operands and bx scratch
    # are full unmasked vregs. Zero padding does not change the result.
    r_pad = _round_up(r, 128)
    a_p = jnp.pad(A, ((0, 0), (0, r_pad - r)))     # [out, r_pad]
    b_p = jnp.pad(B, ((0, r_pad - r), (0, 0)))     # [r_pad, in]

    # Tile selection + batch (sublane) padding.
    tm = min(tm_pref, _round_up(batch, 8))
    m_pad = _round_up(batch, tm)
    if m_pad != batch:
        x = jnp.pad(x, ((0, m_pad - batch), (0, 0)))
    tn = _divisor_tile(out_features, tn_pref, 128)
    tk = _divisor_tile(in_features, tk_pref, 128)

    mt = m_pad // tm
    nt = out_features // tn
    kt = in_features // tk

    def b_index_map(i, j, k):
        # Stream B's K tiles only while j == 0 (the only pass that reads them);
        # afterwards keep requesting the last-fetched tile so no extra DMA is
        # issued for the (unused) B block on j > 0 grid steps.
        return (0, jnp.where(j == 0, k, kt - 1))

    out = pl.pallas_call(
        _lora_linear_kernel,
        out_shape=jax.ShapeDtypeStruct((m_pad, out_features), out_dtype),
        grid_spec=pltpu.PrefetchScalarGridSpec(
            num_scalar_prefetch=0,
            grid=(mt, nt, kt),
            in_specs=[
                pl.BlockSpec((tm, tk), lambda i, j, k: (i, k)),       # x
                pl.BlockSpec((tn, tk), lambda i, j, k: (j, k)),       # W [out, in]
                pl.BlockSpec((r_pad, tk), b_index_map),               # B [r_pad, in]
                pl.BlockSpec((tn, r_pad), lambda i, j, k: (j, 0)),    # A [out, r_pad]
                pl.BlockSpec((1, tn), lambda i, j, k: (0, j)),        # bias
            ],
            out_specs=pl.BlockSpec((tm, tn), lambda i, j, k: (i, j)),
            scratch_shapes=[
                pltpu.VMEM((tm, tn), jnp.float32),     # base-path accumulator
                pltpu.VMEM((tm, r_pad), jnp.float32),  # x @ B^T (LoRA down-proj)
            ],
        ),
        compiler_params=pltpu.CompilerParams(
            # N must be "arbitrary": bx scratch is filled only while j == 0 and
            # scratch is per-core, so the N axis cannot be megacore-split.
            dimension_semantics=("parallel", "arbitrary", "arbitrary"),
            # Safe on all generations (<= v7x's 64 MiB physical VMEM); raises
            # the 16/32 MiB default scoped limits on v5e/v6e.
            vmem_limit_bytes=vmem_limit_bytes,
        ),
    )(x, weight, b_p, a_p, bias2d)

    return out[:batch] if m_pad != batch else out


if __name__ == "__main__":
    batch_size = 8
    in_features = 32
    out_features = 32
    r = 8

    key = jax.random.PRNGKey(0)
    kx, kw, ka, kb = jax.random.split(key, 4)

    # Deterministic init matching LoRALinear.__init__:
    #   weight ~ randn(out, in), bias = zeros, A ~ randn(out, r), B = zeros(r, in)
    x = jax.random.normal(kx, (batch_size, in_features), dtype=jnp.float32)
    weight = jax.random.normal(kw, (out_features, in_features), dtype=jnp.float32)
    bias = jnp.zeros((out_features,), dtype=jnp.float32)
    A = jax.random.normal(ka, (out_features, r), dtype=jnp.float32)
    B = jnp.zeros((r, in_features), dtype=jnp.float32)

    def ref(xv, wv, bv, Av, Bv):
        return xv @ wv.T + (xv @ Bv.T) @ Av.T + bv

    # 1) f32, module-style init (B == 0).
    out = jax.block_until_ready(lora_linear(x, weight, bias, A, B))
    assert out.shape == (batch_size, out_features)
    assert jnp.allclose(out, ref(x, weight, bias, A, B), atol=1e-4, rtol=1e-4)

    # 2) f32, non-zero B / bias so the LoRA path is actually exercised.
    B2 = 0.1 * jax.random.normal(kb, (r, in_features), dtype=jnp.float32)
    bias2 = 0.5 * jnp.ones((out_features,), dtype=jnp.float32)
    out2 = jax.block_until_ready(lora_linear(x, weight, bias2, A, B2))
    assert jnp.allclose(out2, ref(x, weight, bias2, A, B2), atol=1e-4, rtol=1e-4)

    # 3) bf16 parameter path (the production config) vs a reference built from
    #    the same bf16-cast operands.
    xb = x.astype(jnp.bfloat16).astype(jnp.float32)
    wb = weight.astype(jnp.bfloat16).astype(jnp.float32)
    Ab = A.astype(jnp.bfloat16).astype(jnp.float32)
    Bb = B2.astype(jnp.bfloat16).astype(jnp.float32)
    out3 = jax.block_until_ready(
        lora_linear(x, weight, bias2, A, B2, param_dtype=jnp.bfloat16))
    assert jnp.allclose(out3, ref(xb, wb, bias2, Ab, Bb), atol=5e-2, rtol=5e-2)

    print("KERNEL_OK")
</pallas_src>

<mosaic_0001>
module attributes {stable_mosaic.version = 11 : i64} {
  func.func @_lora_linear_kernel(%arg0: i32, %arg1: i32, %arg2: i32, %arg3: memref<8x32xf32, #tpu.memory_space<vmem>>, %arg4: memref<32x32xf32, #tpu.memory_space<vmem>>, %arg5: memref<128x32xf32, #tpu.memory_space<vmem>>, %arg6: memref<32x128xf32, #tpu.memory_space<vmem>>, %arg7: memref<1x32xf32, #tpu.memory_space<vmem>>, %arg8: memref<8x32xf32, #tpu.memory_space<vmem>>, %arg9: memref<8x32xf32, #tpu.memory_space<vmem>>, %arg10: memref<8x128xf32, #tpu.memory_space<vmem>>) attributes {dimension_semantics = [#tpu.dimension_semantics<parallel>, #tpu.dimension_semantics<arbitrary>, #tpu.dimension_semantics<arbitrary>], iteration_bounds = array<i64: 1, 1, 1>, scalar_prefetch = 0 : i64, scratch_operands = 2 : i64, tpu.core_type = #tpu.core_type<tc>, window_params = [{transform_indices = @transform_0, window_bounds = array<i64: 8, 32>}, {transform_indices = @transform_1, window_bounds = array<i64: 32, 32>}, {transform_indices = @transform_2, window_bounds = array<i64: 128, 32>}, {transform_indices = @transform_3, window_bounds = array<i64: 32, 128>}, {transform_indices = @transform_4, window_bounds = array<i64: 1, 32>}, {transform_indices = @transform_5, window_bounds = array<i64: 8, 32>}]} {
    %c0_i32 = arith.constant 0 : i32
    %0 = arith.cmpi eq, %arg2, %c0_i32 : i32
    %1 = arith.extui %0 : i1 to i32
    %c0_i32_0 = arith.constant 0 : i32
    %2 = arith.cmpi ne, %1, %c0_i32_0 : i32
    scf.if %2 {
      %cst_15 = arith.constant 0.000000e+00 : f32
      %20 = vector.broadcast %cst_15 : f32 to vector<8x32xf32>
      %c0_16 = arith.constant 0 : index
      %c0_17 = arith.constant 0 : index
      %21 = vector.load %arg9[%c0_16, %c0_17] : memref<8x32xf32, #tpu.memory_space<vmem>>, vector<8x32xf32>
      tpu.vector_store %arg9[%c0_16, %c0_17], %20 {strides = array<i32>} : memref<8x32xf32, #tpu.memory_space<vmem>>, vector<8x32xf32>,
    } else {
    }
    %c0_i32_1 = arith.constant 0 : i32
    %3 = arith.cmpi eq, %arg1, %c0_i32_1 : i32
    %c0_i32_2 = arith.constant 0 : i32
    %4 = arith.cmpi eq, %arg2, %c0_i32_2 : i32
    %5 = arith.andi %3, %4 : i1
    %6 = arith.extui %5 : i1 to i32
    %c0_i32_3 = arith.constant 0 : i32
    %7 = arith.cmpi ne, %6, %c0_i32_3 : i32
    scf.if %7 {
      %cst_15 = arith.constant 0.000000e+00 : f32
      %20 = vector.broadcast %cst_15 : f32 to vector<8x128xf32>
      %c0_16 = arith.constant 0 : index
      %c0_17 = arith.constant 0 : index
      %21 = vector.load %arg10[%c0_16, %c0_17] : memref<8x128xf32, #tpu.memory_space<vmem>>, vector<8x128xf32>
      tpu.vector_store %arg10[%c0_16, %c0_17], %20 {strides = array<i32>} : memref<8x128xf32, #tpu.memory_space<vmem>>, vector<8x128xf32>,
    } else {
    }
    %c0 = arith.constant 0 : index
    %c0_4 = arith.constant 0 : index
    %8 = vector.load %arg3[%c0, %c0_4] : memref<8x32xf32, #tpu.memory_space<vmem>>, vector<8x32xf32>
    %c0_5 = arith.constant 0 : index
    %c0_6 = arith.constant 0 : index
    %9 = vector.load %arg9[%c0_5, %c0_6] : memref<8x32xf32, #tpu.memory_space<vmem>>, vector<8x32xf32>
    %c0_7 = arith.constant 0 : index
    %c0_8 = arith.constant 0 : index
    %10 = vector.load %arg4[%c0_7, %c0_8] : memref<32x32xf32, #tpu.memory_space<vmem>>, vector<32x32xf32>
    %cst = arith.constant dense<0.000000e+00> : vector<8x32xf32>
    %11 = tpu.matmul %8, %10, %cst {dimension_numbers = #tpu.dot_dimension_numbers<[1], [1], [0], [0], [0, 0, 1, 0], [], []>} : vector<8x32xf32>, vector<32x32xf32>, vector<8x32xf32> -> vector<8x32xf32>
    %12 = arith.addf %9, %11 : vector<8x32xf32>
    %c0_9 = arith.constant 0 : index
    %c0_10 = arith.constant 0 : index
    %13 = vector.load %arg9[%c0_9, %c0_10] : memref<8x32xf32, #tpu.memory_space<vmem>>, vector<8x32xf32>
    tpu.vector_store %arg9[%c0_9, %c0_10], %12 {strides = array<i32>} : memref<8x32xf32, #tpu.memory_space<vmem>>, vector<8x32xf32>,
    %c0_i32_11 = arith.constant 0 : i32
    %14 = arith.cmpi eq, %arg1, %c0_i32_11 : i32
    %15 = arith.extui %14 : i1 to i32
    %c0_i32_12 = arith.constant 0 : i32
    %16 = arith.cmpi ne, %15, %c0_i32_12 : i32
    scf.if %16 {
      %c0_15 = arith.constant 0 : index
      %c0_16 = arith.constant 0 : index
      %20 = vector.load %arg10[%c0_15, %c0_16] : memref<8x128xf32, #tpu.memory_space<vmem>>, vector<8x128xf32>
      %c0_17 = arith.constant 0 : index
      %c0_18 = arith.constant 0 : index
      %21 = vector.load %arg5[%c0_17, %c0_18] : memref<128x32xf32, #tpu.memory_space<vmem>>, vector<128x32xf32>
      %cst_19 = arith.constant dense<0.000000e+00> : vector<8x128xf32>
      %22 = tpu.matmul %8, %21, %cst_19 {dimension_numbers = #tpu.dot_dimension_numbers<[1], [1], [0], [0], [0, 0, 1, 0], [], []>} : vector<8x32xf32>, vector<128x32xf32>, vector<8x128xf32> -> vector<8x128xf32>
      %23 = arith.addf %20, %22 : vector<8x128xf32>
      %c0_20 = arith.constant 0 : index
      %c0_21 = arith.constant 0 : index
      %24 = vector.load %arg10[%c0_20, %c0_21] : memref<8x128xf32, #tpu.memory_space<vmem>>, vector<8x128xf32>
      tpu.vector_store %arg10[%c0_20, %c0_21], %23 {strides = array<i32>} : memref<8x128xf32, #tpu.memory_space<vmem>>, vector<8x128xf32>,
    } else {
    }
    %c0_i32_13 = arith.constant 0 : i32
    %17 = arith.cmpi eq, %arg2, %c0_i32_13 : i32
    %18 = arith.extui %17 : i1 to i32
    %c0_i32_14 = arith.constant 0 : i32
    %19 = arith.cmpi ne, %18, %c0_i32_14 : i32
    scf.if %19 {
      %c0_15 = arith.constant 0 : index
      %c0_16 = arith.constant 0 : index
      %20 = vector.load %arg10[%c0_15, %c0_16] : memref<8x128xf32, #tpu.memory_space<vmem>>, vector<8x128xf32>
      %c0_17 = arith.constant 0 : index
      %c0_18 = arith.constant 0 : index
      %21 = vector.load %arg6[%c0_17, %c0_18] : memref<32x128xf32, #tpu.memory_space<vmem>>, vector<32x128xf32>
      %cst_19 = arith.constant dense<0.000000e+00> : vector<8x32xf32>
      %22 = tpu.matmul %20, %21, %cst_19 {dimension_numbers = #tpu.dot_dimension_numbers<[1], [1], [0], [0], [0, 0, 1, 0], [], []>} : vector<8x128xf32>, vector<32x128xf32>, vector<8x32xf32> -> vector<8x32xf32>
      %c0_20 = arith.constant 0 : index
      %c0_21 = arith.constant 0 : index
      %23 = vector.load %arg9[%c0_20, %c0_21] : memref<8x32xf32, #tpu.memory_space<vmem>>, vector<8x32xf32>
      %24 = arith.addf %23, %22 : vector<8x32xf32>
      %c0_22 = arith.constant 0 : index
      %c0_23 = arith.constant 0 : index
      %25 = vector.load %arg7[%c0_22, %c0_23] : memref<1x32xf32, #tpu.memory_space<vmem>>, vector<1x32xf32>
      %26 = vector.broadcast %25 : vector<1x32xf32> to vector<8x32xf32>
      %27 = arith.addf %24, %26 : vector<8x32xf32>
      %c0_24 = arith.constant 0 : index
      %c0_25 = arith.constant 0 : index
      %28 = vector.load %arg8[%c0_24, %c0_25] : memref<8x32xf32, #tpu.memory_space<vmem>>, vector<8x32xf32>
      tpu.vector_store %arg8[%c0_24, %c0_25], %27 {strides = array<i32>} : memref<8x32xf32, #tpu.memory_space<vmem>>, vector<8x32xf32>,
    } else {
    }
    return
  }
  func.func @transform_0(%arg0: i32, %arg1: i32, %arg2: i32) -> (i32, i32) {
    %c0_i32 = arith.constant 0 : i32
    return %arg0, %arg2 : i32, i32
  }
  func.func @transform_1(%arg0: i32, %arg1: i32, %arg2: i32) -> (i32, i32) {
    %c0_i32 = arith.constant 0 : i32
    return %arg1, %arg2 : i32, i32
  }
  func.func @transform_2(%arg0: i32, %arg1: i32, %arg2: i32) -> (i32, i32) {
    %c0_i32 = arith.constant 0 : i32
    %0 = arith.cmpi eq, %arg1, %c0_i32 : i32
    %c0_i32_0 = arith.constant 0 : i32
    %1 = arith.select %0, %arg2, %c0_i32_0 : i32
    %c0_i32_1 = arith.constant 0 : i32
    %c0_i32_2 = arith.constant 0 : i32
    return %c0_i32_1, %1 : i32, i32
  }
  func.func @transform_3(%arg0: i32, %arg1: i32, %arg2: i32) -> (i32, i32) {
    %c0_i32 = arith.constant 0 : i32
    %c0_i32_0 = arith.constant 0 : i32
    return %arg1, %c0_i32 : i32, i32
  }
  func.func @transform_4(%arg0: i32, %arg1: i32, %arg2: i32) -> (i32, i32) {
    %c0_i32 = arith.constant 0 : i32
    %c0_i32_0 = arith.constant 0 : i32
    return %c0_i32, %arg1 : i32, i32
  }
  func.func @transform_5(%arg0: i32, %arg1: i32, %arg2: i32) -> (i32, i32) {
    %c0_i32 = arith.constant 0 : i32
    return %arg0, %arg1 : i32, i32
  }
}

</mosaic_0001>

<llo_original>
// kernel: tpu_custom_call.1
$region0: #{tpu_custom_call.1}
  #allocation0 [shape = 'u32[]', space=smem, size = 0x4, offset = 0x4, fixed_abs, tag = 'smem constant byte address 0x4 - core index']
  #allocation1 [shape = 'u32[144,128]{1,0:T(1,128)}', space=vmem, size = 0x12000, scoped, tag = 'internal scratch']
  #allocation2 [shape = 'f32[8,32]{1,0:T(8,128)}', space=vmem, size = 0x1000, scoped, tag = 'scratch operand']
  #allocation3 [shape = 'f32[8,128]{1,0:T(8,128)}', space=vmem, size = 0x1000, scoped, tag = 'scratch operand']
  %s0 = inlined_call_operand.vmem [shape: f32[8,32], index: 0, kind: input, shape index: {}]
  %s1 = inlined_call_operand.vmem [shape: f32[32,32], index: 1, kind: input, shape index: {}]
  %s2 = inlined_call_operand.vmem [shape: f32[128,32], index: 2, kind: input, shape index: {}]
  %s3 = inlined_call_operand.vmem [shape: f32[32,128], index: 3, kind: input, shape index: {}]
  %s4 = inlined_call_operand.vmem [shape: f32[1,32], index: 4, kind: input, shape index: {}]
  %s5 = inlined_call_operand.hbm [shape: f32[8,32], index: 5, kind: output, shape index: {}]
  %s6 = sld [smem:[#allocation0]]
  $region46: #{tpu_custom_call.1} parent=0
    _
  %s8 = ssub.s32 1, %s6
  %s9 = scalar_select 0, %s8, %s6
  $region1: #{tpu_custom_call.1} parent=0
    #allocation4 [shape = 'u8[4096]{0}', space=vmem, size = 0x1000, scoped, tag = 'output window, operand 0, single buffered']
    #allocation5 [shape = 's32[1]{0}', space=sflag, size = 0x4, scoped, tag = 'scoped memory for tpu_custom_call.1']
    %10 = vsyncpa [#allocation5], 0
    // Predicated region
    $region2: #{tpu_custom_call.1} parent=1 // pred_check
      _
    $region3: #{tpu_custom_call.1} parent=1 // pred_check_branch
      %12 = sbr.rel (0) target = $region5
    $region4: #{tpu_custom_call.1} parent=1 // pred_region
      _
    $region5: #{tpu_custom_call.1} parent=1 // pred_fallthru
      _
    // Predicated region
    $region6: #{tpu_custom_call.1} parent=1 // pred_check
      _
    $region7: #{tpu_custom_call.1} parent=1 // pred_check_branch
      %14 = sbr.rel (0) target = $region9
    $region8: #{tpu_custom_call.1} parent=1 // pred_region
      _
    $region9: #{tpu_custom_call.1} parent=1 // pred_fallthru
      _
    // Predicated region
    $region10: #{tpu_custom_call.1} parent=1 // pred_check
      _
    $region11: #{tpu_custom_call.1} parent=1 // pred_check_branch
      %16 = sbr.rel (0) target = $region13
    $region12: #{tpu_custom_call.1} parent=1 // pred_region
      %p17 = scmp.eq.s32.totalorder 0, 0
      %s18 = scalar_select %p17, 0, 0
      %p19 = scmp.lt.s32.totalorder %s18, 0
      %s20 = scalar_select %p19, %s18, 0
      %s21 = smul.addr %s20, 8
      %s22 = scalar_lea.vmem %s2, %s21
      %p23 = scmp.eq.s32.totalorder 0, 0
      %s24 = scalar_select %p23, 0, 0
    $region13: #{tpu_custom_call.1} parent=1 // pred_fallthru
      _
    // Predicated region
    $region14: #{tpu_custom_call.1} parent=1 // pred_check
      _
    $region15: #{tpu_custom_call.1} parent=1 // pred_check_branch
      %26 = sbr.rel (0) target = $region17
    $region16: #{tpu_custom_call.1} parent=1 // pred_region
      _
    $region17: #{tpu_custom_call.1} parent=1 // pred_fallthru
      _
    // Predicated region
    $region18: #{tpu_custom_call.1} parent=1 // pred_check
      _
    $region19: #{tpu_custom_call.1} parent=1 // pred_check_branch
      %28 = sbr.rel (0) target = $region21
    $region20: #{tpu_custom_call.1} parent=1 // pred_region
      _
    $region21: #{tpu_custom_call.1} parent=1 // pred_fallthru
      _
    %p29 = scmp.eq.s32.totalorder 0, 0
    %s30 = scalar_select %p29, 0, 0
    %p31 = scmp.lt.s32.totalorder %s30, 0
    %s32 = scalar_select %p31, %s30, 0
    %s33 = smul.addr %s32, 8
    %s34 = scalar_lea.vmem %s2, %s33
    %p35 = scmp.eq.s32.totalorder 0, 0
    %s36 = scalar_select %p35, 0, 0
    %p37 = scmp.lt.s32.totalorder %s36, 0
    %s38 = scalar_select %p37, %s36, 0
    %s39 = smul.addr %s38, 8
    %s40 = scalar_lea.vmem %s2, %s39
    %p41 = scmp.eq.s32.totalorder 0, 0
    %s42 = scalar_select %p41, 0, 0
    %p43 = scmp.eq.s32.totalorder 0, 0
    // Predicated region
    $region22: #{tpu_custom_call.1} parent=1 // pred_check
      %p44 = pneg %p43
    $region23: #{tpu_custom_call.1} parent=1 // pred_check_branch
      %46 = sbr.rel (%p44) target = $region25
    $region24: #{tpu_custom_call.1} parent=1 // pred_region
      %vm47 = vcmask 261120
      %48 = vst.msk [vmem:[#allocation2] sm:$0xff] %vm47, 0.0
    $region25: #{tpu_custom_call.1} parent=1 // pred_fallthru
      _
    %p49 = scmp.eq.s32.totalorder 0, 0
    %p50 = pnand %p49, %p43
    %p51 = pneg %p50
    // Predicated region
    $region26: #{tpu_custom_call.1} parent=1 // pred_check
      _
    $region27: #{tpu_custom_call.1} parent=1 // pred_check_branch
      %53 = sbr.rel (%p50) target = $region29
    $region28: #{tpu_custom_call.1} parent=1 // pred_region
      %54 = vst [vmem:[#allocation3] sm:$0xff] 0.0
    $region29: #{tpu_custom_call.1} parent=1 // pred_fallthru
      _
    %v55 = vld [vmem:[%s0] sm:$0xff]
    %v56 = vld [vmem:[#allocation2] sm:$0xff]
    %v57 = vld [vmem:[%s1] sm:$0xff]
    %v58 = vld [vmem:[%s1 + $0x8] sm:$0xff]
    %v59 = vld [vmem:[%s1 + $0x10] sm:$0xff]
    %v60 = vld [vmem:[%s1 + $0x18] sm:$0xff]
    %vm61 = vcmask 261120
    %v63 = vsel %vm61, %v55, 0
    %v66 = vsel %vm61, %v57, 0
    %v69 = vsel %vm61, %v58, 0
    %v72 = vsel %vm61, %v59, 0
    %v75 = vsel %vm61, %v60, 0
    %77 = vmatprep.subr.mxu0 0.0
    %78 = vmatpush1.xpose.msra.mxu0 %v66
    %79 = vmatprep.subr.mxu0 0.0
    %80 = vmatpush1.xpose.msra.mxu0 %v69
    %81 = vmatprep.subr.mxu0 0.0
    %82 = vmatpush1.xpose.msra.mxu0 %v72
    %83 = vmatprep.subr.mxu0 0.0
    %84 = vmatpush1.xpose.msra.mxu0 %v75
    %85 = vmatprep.subr.mxu0 0.0
    %86 = vmatpush1.xpose.msra.mxu0 0.0
    %87 = vmatprep.subr.mxu0 0.0
    %88 = vmatpush1.xpose.msra.mxu0 0.0
    %89 = vmatprep.subr.mxu0 0.0
    %90 = vmatpush1.xpose.msra.mxu0 0.0
    %91 = vmatprep.subr.mxu0 0.0
    %92 = vmatpush1.xpose.msra.mxu0 0.0
    %93 = vmatprep.subr.mxu0 0.0
    %94 = vmatpush1.xpose.msra.mxu0 0.0
    %95 = vmatprep.subr.mxu0 0.0
    %96 = vmatpush1.xpose.msra.mxu0 0.0
    %97 = vmatprep.subr.mxu0 0.0
    %98 = vmatpush1.xpose.msra.mxu0 0.0
    %99 = vmatprep.subr.mxu0 0.0
    %100 = vmatpush1.xpose.msra.mxu0 0.0
    %101 = vmatprep.subr.mxu0 0.0
    %102 = vmatpush1.xpose.msra.mxu0 0.0
    %103 = vmatprep.subr.mxu0 0.0
    %104 = vmatpush1.xpose.msra.mxu0 0.0
    %105 = vmatprep.subr.mxu0 0.0
    %106 = vmatpush1.xpose.msra.mxu0 0.0
    %107 = vmatprep.subr.mxu0 0.0
    %108 = vmatpush1.xpose.msra.mxu0 0.0
    %109 = vmatprep.subr.mxu0 0.0
    %110 = vmatpush1.xpose.msra.mxu0 0.0
    %111 = vmatprep.subr.mxu0 0.0
    %112 = vmatpush1.xpose.msra.mxu0 0.0
    %113 = vmatprep.subr.mxu0 0.0
    %114 = vmatpush1.xpose.msra.mxu0 0.0
    %115 = vmatprep.subr.mxu0 0.0
    %116 = vmatpush1.xpose.msra.mxu0 0.0
    %117 = vmatprep.subr.mxu0 0.0
    %118 = vmatpush1.xpose.msra.mxu0 0.0
    %119 = vmatprep.subr.mxu0 0.0
    %120 = vmatpush1.xpose.msra.mxu0 0.0
    %121 = vmatprep.subr.mxu0 0.0
    %122 = vmatpush1.xpose.msra.mxu0 0.0
    %123 = vmatprep.subr.mxu0 0.0
    %124 = vmatpush1.xpose.msra.mxu0 0.0
    %125 = vmatprep.subr.mxu0 0.0
    %126 = vmatpush1.xpose.msra.mxu0 0.0
    %127 = vmatprep.subr.mxu0 0.0
    %128 = vmatpush1.xpose.msra.mxu0 0.0
    %129 = vmatprep.subr.mxu0 0.0
    %130 = vmatpush1.xpose.msra.mxu0 0.0
    %131 = vmatprep.subr.mxu0 0.0
    %132 = vmatpush1.xpose.msra.mxu0 0.0
    %133 = vmatprep.subr.mxu0 0.0
    %134 = vmatpush1.xpose.msra.mxu0 0.0
    %135 = vmatprep.subr.mxu0 0.0
    %136 = vmatpush1.xpose.msra.mxu0 0.0
    %137 = vmatprep.subr.mxu0 0.0
    %138 = vmatpush1.xpose.msra.mxu0 0.0
    %139 = vmatprep.subr.mxu0 0.0
    %140 = vmatpush1.xpose.msra.mxu0 0.0
    %141 = vmatprep.mubr.f32.mxu0 0.0
    %142 = vmatmul.mubr.f32.gmra.mrb[0].mxu0 %v63
    %v143 = vpop.f32.mrb[0].mxu0
    %v144 = vadd.f32 0.0, %v143
    %v145 = vpop.f32.mrb[0].mxu0
    %146 = vdwg.mxu0
    %v147 = vadd.f32 %v56, %v144
    %148 = vst.msk [vmem:[#allocation2] sm:$0xff] %vm61, %v147
    // Predicated region
    $region30: #{tpu_custom_call.1} parent=1 // pred_check
      %p149 = pneg %p49
    $region31: #{tpu_custom_call.1} parent=1 // pred_check_branch
      %151 = sbr.rel (%p149) target = $region33
    $region32: #{tpu_custom_call.1} parent=1 // pred_region
      %v152 = vld [vmem:[#allocation3] sm:$0xff]
      %v153 = vld [vmem:[%s40] sm:$0xff]
      %v154 = vld [vmem:[%s40 + $0x8] sm:$0xff]
      %v155 = vld [vmem:[%s40 + $0x10] sm:$0xff]
      %v156 = vld [vmem:[%s40 + $0x18] sm:$0xff]
      %v157 = vld [vmem:[%s40 + $0x20] sm:$0xff]
      %v158 = vld [vmem:[%s40 + $0x28] sm:$0xff]
      %v159 = vld [vmem:[%s40 + $0x30] sm:$0xff]
      %v160 = vld [vmem:[%s40 + $0x38] sm:$0xff]
      %v161 = vld [vmem:[%s40 + $0x40] sm:$0xff]
      %v162 = vld [vmem:[%s40 + $0x48] sm:$0xff]
      %v163 = vld [vmem:[%s40 + $0x50] sm:$0xff]
      %v164 = vld [vmem:[%s40 + $0x58] sm:$0xff]
      %v165 = vld [vmem:[%s40 + $0x60] sm:$0xff]
      %v166 = vld [vmem:[%s40 + $0x68] sm:$0xff]
      %v167 = vld [vmem:[%s40 + $0x70] sm:$0xff]
      %v168 = vld [vmem:[%s40 + $0x78] sm:$0xff]
      %v170 = vsel %vm61, %v153, 0
      %v173 = vsel %vm61, %v154, 0
      %v176 = vsel %vm61, %v155, 0
      %v179 = vsel %vm61, %v156, 0
      %v182 = vsel %vm61, %v157, 0
      %v185 = vsel %vm61, %v158, 0
      %v188 = vsel %vm61, %v159, 0
      %v191 = vsel %vm61, %v160, 0
      %v194 = vsel %vm61, %v161, 0
      %v197 = vsel %vm61, %v162, 0
      %v200 = vsel %vm61, %v163, 0
      %v203 = vsel %vm61, %v164, 0
      %v206 = vsel %vm61, %v165, 0
      %v209 = vsel %vm61, %v166, 0
      %v212 = vsel %vm61, %v167, 0
      %v215 = vsel %vm61, %v168, 0
      %217 = vmatprep.subr.mxu0 0.0
      %218 = vmatpush1.xpose.msra.mxu0 %v170
      %219 = vmatprep.subr.mxu0 0.0
      %220 = vmatpush1.xpose.msra.mxu0 %v173
      %221 = vmatprep.subr.mxu0 0.0
      %222 = vmatpush1.xpose.msra.mxu0 %v176
      %223 = vmatprep.subr.mxu0 0.0
      %224 = vmatpush1.xpose.msra.mxu0 %v179
      %225 = vmatprep.subr.mxu0 0.0
      %226 = vmatpush1.xpose.msra.mxu0 %v182
      %227 = vmatprep.subr.mxu0 0.0
      %228 = vmatpush1.xpose.msra.mxu0 %v185
      %229 = vmatprep.subr.mxu0 0.0
      %230 = vmatpush1.xpose.msra.mxu0 %v188
      %231 = vmatprep.subr.mxu0 0.0
      %232 = vmatpush1.xpose.msra.mxu0 %v191
      %233 = vmatprep.subr.mxu0 0.0
      %234 = vmatpush1.xpose.msra.mxu0 %v194
      %235 = vmatprep.subr.mxu0 0.0
      %236 = vmatpush1.xpose.msra.mxu0 %v197
      %237 = vmatprep.subr.mxu0 0.0
      %238 = vmatpush1.xpose.msra.mxu0 %v200
      %239 = vmatprep.subr.mxu0 0.0
      %240 = vmatpush1.xpose.msra.mxu0 %v203
      %241 = vmatprep.subr.mxu0 0.0
      %242 = vmatpush1.xpose.msra.mxu0 %v206
      %243 = vmatprep.subr.mxu0 0.0
      %244 = vmatpush1.xpose.msra.mxu0 %v209
      %245 = vmatprep.subr.mxu0 0.0
      %246 = vmatpush1.xpose.msra.mxu0 %v212
      %247 = vmatprep.subr.mxu0 0.0
      %248 = vmatpush1.xpose.msra.mxu0 %v215
      %249 = vmatprep.subr.mxu0 0.0
      %250 = vmatpush1.xpose.msra.mxu0 0.0
      %251 = vmatprep.subr.mxu0 0.0
      %252 = vmatpush1.xpose.msra.mxu0 0.0
      %253 = vmatprep.subr.mxu0 0.0
      %254 = vmatpush1.xpose.msra.mxu0 0.0
      %255 = vmatprep.subr.mxu0 0.0
      %256 = vmatpush1.xpose.msra.mxu0 0.0
      %257 = vmatprep.subr.mxu0 0.0
      %258 = vmatpush1.xpose.msra.mxu0 0.0
      %259 = vmatprep.subr.mxu0 0.0
      %260 = vmatpush1.xpose.msra.mxu0 0.0
      %261 = vmatprep.subr.mxu0 0.0
      %262 = vmatpush1.xpose.msra.mxu0 0.0
      %263 = vmatprep.subr.mxu0 0.0
      %264 = vmatpush1.xpose.msra.mxu0 0.0
      %265 = vmatprep.subr.mxu0 0.0
      %266 = vmatpush1.xpose.msra.mxu0 0.0
      %267 = vmatprep.subr.mxu0 0.0
      %268 = vmatpush1.xpose.msra.mxu0 0.0
      %269 = vmatprep.subr.mxu0 0.0
      %270 = vmatpush1.xpose.msra.mxu0 0.0
      %271 = vmatprep.subr.mxu0 0.0
      %272 = vmatpush1.xpose.msra.mxu0 0.0
      %273 = vmatprep.subr.mxu0 0.0
      %274 = vmatpush1.xpose.msra.mxu0 0.0
      %275 = vmatprep.subr.mxu0 0.0
      %276 = vmatpush1.xpose.msra.mxu0 0.0
      %277 = vmatprep.subr.mxu0 0.0
      %278 = vmatpush1.xpose.msra.mxu0 0.0
      %279 = vmatprep.subr.mxu0 0.0
      %280 = vmatpush1.xpose.msra.mxu0 0.0
      %281 = vmatprep.mubr.f32.mxu0 0.0
      %282 = vmatmul.mubr.f32.gmra.mrb[0].mxu0 %v63
      %v283 = vpop.f32.mrb[0].mxu0
      %v284 = vadd.f32 0.0, %v283
      %v285 = vpop.f32.mrb[0].mxu0
      %286 = vdwg.mxu0
      %v287 = vadd.f32 %v152, %v284
      %288 = vst [vmem:[#allocation3] sm:$0xff] %v287
    $region33: #{tpu_custom_call.1} parent=1 // pred_fallthru
      _
    // Predicated region
    $region34: #{tpu_custom_call.1} parent=1 // pred_check
      %p289 = pneg %p43
    $region35: #{tpu_custom_call.1} parent=1 // pred_check_branch
      %291 = sbr.rel (%p289) target = $region37
    $region36: #{tpu_custom_call.1} parent=1 // pred_region
      %v292 = vld [vmem:[#allocation3] sm:$0xff]
      %v293 = vld [vmem:[%s3] sm:$0xff]
      %v294 = vld [vmem:[%s3 + $0x8] sm:$0xff]
      %v295 = vld [vmem:[%s3 + $0x10] sm:$0xff]
      %v296 = vld [vmem:[%s3 + $0x18] sm:$0xff]
      %297 = vmatprep.subr.mxu0 0.0
      %298 = vmatpush1.xpose.msra.mxu0 %v293
      %299 = vmatprep.subr.mxu0 0.0
      %300 = vmatpush1.xpose.msra.mxu0 %v294
      %301 = vmatprep.subr.mxu0 0.0
      %302 = vmatpush1.xpose.msra.mxu0 %v295
      %303 = vmatprep.subr.mxu0 0.0
      %304 = vmatpush1.xpose.msra.mxu0 %v296
      %305 = vmatprep.subr.mxu0 0.0
      %306 = vmatpush1.xpose.msra.mxu0 0.0
      %307 = vmatprep.subr.mxu0 0.0
      %308 = vmatpush1.xpose.msra.mxu0 0.0
      %309 = vmatprep.subr.mxu0 0.0
      %310 = vmatpush1.xpose.msra.mxu0 0.0
      %311 = vmatprep.subr.mxu0 0.0
      %312 = vmatpush1.xpose.msra.mxu0 0.0
      %313 = vmatprep.subr.mxu0 0.0
      %314 = vmatpush1.xpose.msra.mxu0 0.0
      %315 = vmatprep.subr.mxu0 0.0
      %316 = vmatpush1.xpose.msra.mxu0 0.0
      %317 = vmatprep.subr.mxu0 0.0
      %318 = vmatpush1.xpose.msra.mxu0 0.0
      %319 = vmatprep.subr.mxu0 0.0
      %320 = vmatpush1.xpose.msra.mxu0 0.0
      %321 = vmatprep.subr.mxu0 0.0
      %322 = vmatpush1.xpose.msra.mxu0 0.0
      %323 = vmatprep.subr.mxu0 0.0
      %324 = vmatpush1.xpose.msra.mxu0 0.0
      %325 = vmatprep.subr.mxu0 0.0
      %326 = vmatpush1.xpose.msra.mxu0 0.0
      %327 = vmatprep.subr.mxu0 0.0
      %328 = vmatpush1.xpose.msra.mxu0 0.0
      %329 = vmatprep.subr.mxu0 0.0
      %330 = vmatpush1.xpose.msra.mxu0 0.0
      %331 = vmatprep.subr.mxu0 0.0
      %332 = vmatpush1.xpose.msra.mxu0 0.0
      %333 = vmatprep.subr.mxu0 0.0
      %334 = vmatpush1.xpose.msra.mxu0 0.0
      %335 = vmatprep.subr.mxu0 0.0
      %336 = vmatpush1.xpose.msra.mxu0 0.0
      %337 = vmatprep.subr.mxu0 0.0
      %338 = vmatpush1.xpose.msra.mxu0 0.0
      %339 = vmatprep.subr.mxu0 0.0
      %340 = vmatpush1.xpose.msra.mxu0 0.0
      %341 = vmatprep.subr.mxu0 0.0
      %342 = vmatpush1.xpose.msra.mxu0 0.0
      %343 = vmatprep.subr.mxu0 0.0
      %344 = vmatpush1.xpose.msra.mxu0 0.0
      %345 = vmatprep.subr.mxu0 0.0
      %346 = vmatpush1.xpose.msra.mxu0 0.0
      %347 = vmatprep.subr.mxu0 0.0
      %348 = vmatpush1.xpose.msra.mxu0 0.0
      %349 = vmatprep.subr.mxu0 0.0
      %350 = vmatpush1.xpose.msra.mxu0 0.0
      %351 = vmatprep.subr.mxu0 0.0
      %352 = vmatpush1.xpose.msra.mxu0 0.0
      %353 = vmatprep.subr.mxu0 0.0
      %354 = vmatpush1.xpose.msra.mxu0 0.0
      %355 = vmatprep.subr.mxu0 0.0
      %356 = vmatpush1.xpose.msra.mxu0 0.0
      %357 = vmatprep.subr.mxu0 0.0
      %358 = vmatpush1.xpose.msra.mxu0 0.0
      %359 = vmatprep.subr.mxu0 0.0
      %360 = vmatpush1.xpose.msra.mxu0 0.0
      %361 = vmatprep.mubr.f32.mxu0 0.0
      %362 = vmatmul.mubr.f32.gmra.mrb[0].mxu0 %v292
      %v363 = vpop.f32.mrb[0].mxu0
      %v364 = vadd.f32 0.0, %v363
      %v365 = vpop.f32.mrb[0].mxu0
      %366 = vdwg.mxu0
      %v367 = vld [vmem:[#allocation2] sm:$0xff]
      %v368 = vadd.f32 %v367, %v364
      %v369 = vld [vmem:[%s4] sm:$0x1]
      %v371 = vlaneseq
      %v372 = vshrl.u32 %v371, 7
      %v373 = vsub.s32 0, %v372
      %v374 = vrot.slane %v369, %v373
      %v376 = vadd.f32 %v368, %v374
      %377 = vst.msk [vmem:[#allocation4] sm:$0xff] %vm61, %v376
    $region37: #{tpu_custom_call.1} parent=1 // pred_fallthru
      _
    // Predicated region
    $region38: #{tpu_custom_call.1} parent=1 // pred_check
      _
    $region39: #{tpu_custom_call.1} parent=1 // pred_check_branch
      %379 = sbr.rel (0) target = $region41
    $region40: #{tpu_custom_call.1} parent=1 // pred_region
      %s381 = ssub.s32 128, 128
      %382 = vsyncadd [#allocation5], %s381
      %s384 = sshll.u32 [#allocation4], 4
      %s385 = int_to_ptr.vmem [resolvable:$true] %s384
      %387 = dma.vmem_to_hbm [thread:$0]  %s385, 128, %s5, [#allocation5]
    $region41: #{tpu_custom_call.1} parent=1 // pred_fallthru
      _
    // Predicated region
    $region42: #{tpu_custom_call.1} parent=1 // pred_check
      _
    $region43: #{tpu_custom_call.1} parent=1 // pred_check_branch
      %389 = sbr.rel (0) target = $region45
    $region44: #{tpu_custom_call.1} parent=1 // pred_region
      %390 = dma.done [#allocation5], 128
    $region45: #{tpu_custom_call.1} parent=1 // pred_fallthru
      _
    %391 = vsyncpa [#allocation5], 1

</llo_original>
